<compile_context>
chip_gen: v7x
topology: tpu7x:2x2x1
jax: 0.10.0
libtpu: 0.0.40
codegen_flags: <defaults>
</compile_context>

<pallas_src>
import jax
import jax.numpy as jnp
from jax.experimental import pallas as pl
from jax.experimental.pallas import tpu as pltpu


def _biasfree_ln_kernel(x_ref, w_ref, o_ref):
    # x_ref: (TR, C) tile of rows; w_ref: (1, C) f32 weight (resident block).
    x = x_ref[...].astype(jnp.float32)
    c_inv = jnp.float32(1.0 / x.shape[-1])
    # Two independent lane reductions (issue back-to-back on the XLU); no
    # (TR, C) centered temporary is materialized.
    s1 = jnp.sum(x, axis=-1, keepdims=True)
    s2 = jnp.sum(x * x, axis=-1, keepdims=True)
    mean = s1 * c_inv
    var = jnp.maximum(s2 * c_inv - mean * mean, 0.0)   # biased (ddof=0), >= 0
    inv = jax.lax.rsqrt(var + 1e-5)                    # (TR, 1), EUP
    # (TR,1) * (1,C) broadcast, then scale the *un-centered* x.
    o_ref[...] = (x * (inv * w_ref[...])).astype(o_ref.dtype)


def _round_up(v, m):
    return ((v + m - 1) // m) * m


def biasfree_layernorm(x, weight, *, tile_rows=None):
    """x: (..., C); weight: (C,). Returns same shape/dtype as x."""
    orig_shape = x.shape
    C = orig_shape[-1]
    assert weight.shape == (C,)

    # Flatten leading dims to rows: (N, C). Reduction is strictly per-row, so
    # the partial last block (padded/stale rows) can never contaminate real
    # rows, and Pallas only writes the in-bounds rows back.
    # NOTE: for C < 128 the last dim runs on masked lanes; a channels-on-
    # sublanes layout would be lane-denser, but we do NOT add an HBM transpose
    # pass for it (HBM bytes, the binding resource, would be unchanged).
    x2 = x.reshape(-1, C)
    N = x2.shape[0]

    itemsize = jnp.dtype(x.dtype).itemsize
    # Sublane multiple for the dtype: 8 for f32, 16 for bf16, 32 for int8.
    sub = max(8, 32 // itemsize)

    # Generation-aware VMEM capacity (per TensorCore); fall back to the most
    # conservative (v7x, 64 MiB) if the query is unavailable.
    try:
        vmem_cap = int(pltpu.get_tpu_info().vmem_capacity_bytes)
    except Exception:
        vmem_cap = 64 << 20
    small_vmem = vmem_cap <= (64 << 20)          # v7x-like part

    if tile_rows is None:
        # Size the block purely by bytes of *input*: ~4 MiB on 64-MiB-VMEM
        # parts, ~8 MiB on 128-MiB parts. At >= 2-4 MiB the ~0.35 us per-grid-
        # step overhead is amortized to a few percent of HBM-roofline time.
        target_block_bytes = (4 << 20) if small_vmem else (8 << 20)
        tr = (target_block_bytes // (C * itemsize) // sub) * sub
        tr = max(sub, tr)
    else:
        tr = max(sub, (tile_rows // sub) * sub)

    # Keep >= 2 blocks in the grid so dimension_semantics=("parallel",) can
    # shard rows across both TensorCores on v7x (harmless on 1-TC parts).
    tr = min(tr, max(sub, _round_up(pl.cdiv(N, 2), sub)))
    # Never allocate more rows than the (rounded-up) problem actually has.
    tr = min(tr, _round_up(N, sub))
    tile_rows = tr

    grid = (pl.cdiv(N, tile_rows),)

    # VMEM budget: double-buffered input + output blocks; only budget an f32
    # staging temp when the input is narrower than f32 (the astype is a no-op
    # for f32). Small fixed slack for the resident weight + compiler scratch.
    blk_in = tile_rows * C * itemsize
    blk_f32 = tile_rows * C * 4
    extra_f32 = 0 if itemsize >= 4 else 2 * blk_f32
    vmem_need = 2 * blk_in + 2 * blk_in + extra_f32 + (2 << 20)
    hard_cap = (56 << 20) if small_vmem else (100 << 20)
    vmem_limit = int(min(hard_cap, max(16 << 20, vmem_need)))

    w2 = weight.astype(jnp.float32).reshape(1, C)

    out = pl.pallas_call(
        _biasfree_ln_kernel,
        out_shape=jax.ShapeDtypeStruct((N, C), x.dtype),
        grid_spec=pltpu.PrefetchScalarGridSpec(
            num_scalar_prefetch=0,
            grid=grid,
            in_specs=[
                pl.BlockSpec((tile_rows, C), lambda i: (i, 0)),
                pl.BlockSpec((1, C), lambda i: (0, 0)),   # resident weight
            ],
            out_specs=pl.BlockSpec((tile_rows, C), lambda i: (i, 0)),
        ),
        compiler_params=pltpu.CompilerParams(
            dimension_semantics=("parallel",),
            vmem_limit_bytes=vmem_limit,
        ),
    )(x2, w2)

    return out.reshape(orig_shape)


def _reference(x, weight):
    x32 = x.astype(jnp.float32)
    var = jnp.var(x32, axis=-1, keepdims=True)  # biased (ddof=0)
    return (x32 / jnp.sqrt(var + 1e-5) * weight.astype(jnp.float32)).astype(x.dtype)


if __name__ == "__main__":
    key = jax.random.PRNGKey(0)

    # Small shapes consistent with the module (normalized_shape = C).
    B, S, C = 2, 8, 32
    x = jax.random.normal(key, (B, S, C), dtype=jnp.float32)
    weight = jnp.ones((C,), dtype=jnp.float32)  # module init: ones(C)

    y = jax.block_until_ready(biasfree_layernorm(x, weight))
    y_ref = _reference(x, weight)
    assert y.shape == x.shape and y.dtype == x.dtype
    assert jnp.allclose(y, y_ref, atol=1e-5, rtol=1e-5)

    # Second check: rows not a multiple of the tile, C not a multiple of 128,
    # and non-trivial weight (exercises the cdiv partial-block path).
    x2 = jax.random.normal(jax.random.PRNGKey(1), (3, 7, 48), dtype=jnp.float32)
    w2 = jax.random.normal(jax.random.PRNGKey(2), (48,), dtype=jnp.float32)
    y2 = jax.block_until_ready(biasfree_layernorm(x2, w2))
    y2_ref = _reference(x2, w2)
    assert y2.shape == x2.shape and y2.dtype == x2.dtype
    assert jnp.allclose(y2, y2_ref, atol=1e-5, rtol=1e-5)

    # Third check: explicit tile override + bf16 path (sub-f32 VMEM budgeting).
    x3 = jax.random.normal(jax.random.PRNGKey(3), (4, 16, 64), dtype=jnp.bfloat16)
    w3 = jax.random.normal(jax.random.PRNGKey(4), (64,), dtype=jnp.bfloat16)
    y3 = jax.block_until_ready(biasfree_layernorm(x3, w3, tile_rows=32))
    y3_ref = _reference(x3, w3)
    assert y3.shape == x3.shape and y3.dtype == x3.dtype
    assert jnp.allclose(y3.astype(jnp.float32), y3_ref.astype(jnp.float32),
                        atol=2e-2, rtol=2e-2)

    print("KERNEL_OK")
</pallas_src>

<mosaic_0001>
module attributes {stable_mosaic.version = 11 : i64} {
  func.func @_biasfree_ln_kernel(%arg0: i32, %arg1: memref<8x32xf32, #tpu.memory_space<vmem>>, %arg2: memref<1x32xf32, #tpu.memory_space<vmem>>, %arg3: memref<8x32xf32, #tpu.memory_space<vmem>>) attributes {dimension_semantics = [#tpu.dimension_semantics<parallel>], iteration_bounds = array<i64: 2>, scalar_prefetch = 0 : i64, scratch_operands = 0 : i64, tpu.core_type = #tpu.core_type<tc>, window_params = [{transform_indices = @transform_0, window_bounds = array<i64: 8, 32>}, {pipeline_mode = #tpu.pipeline_mode<synchronous>, transform_indices = @transform_1, window_bounds = array<i64: 1, 32>}, {transform_indices = @transform_2, window_bounds = array<i64: 8, 32>}]} {
    %c0 = arith.constant 0 : index
    %c0_0 = arith.constant 0 : index
    %0 = vector.load %arg1[%c0, %c0_0] : memref<8x32xf32, #tpu.memory_space<vmem>>, vector<8x32xf32>
    %cst = arith.constant dense<0.000000e+00> : vector<8xf32>
    %1 = vector.multi_reduction <add>, %0, %cst [1] : vector<8x32xf32> to vector<8xf32>
    %2 = vector.shape_cast %1 : vector<8xf32> to vector<8x1xf32>
    %3 = arith.mulf %0, %0 : vector<8x32xf32>
    %cst_1 = arith.constant dense<0.000000e+00> : vector<8xf32>
    %4 = vector.multi_reduction <add>, %3, %cst_1 [1] : vector<8x32xf32> to vector<8xf32>
    %5 = vector.shape_cast %4 : vector<8xf32> to vector<8x1xf32>
    %cst_2 = arith.constant 3.125000e-02 : f32
    %6 = vector.broadcast %cst_2 : f32 to vector<8x1xf32>
    %7 = arith.mulf %2, %6 : vector<8x1xf32>
    %cst_3 = arith.constant 3.125000e-02 : f32
    %8 = vector.broadcast %cst_3 : f32 to vector<8x1xf32>
    %9 = arith.mulf %5, %8 : vector<8x1xf32>
    %10 = arith.mulf %7, %7 : vector<8x1xf32>
    %11 = arith.subf %9, %10 : vector<8x1xf32>
    %cst_4 = arith.constant 0.000000e+00 : f32
    %12 = vector.broadcast %cst_4 : f32 to vector<8x1xf32>
    %13 = arith.maximumf %11, %12 : vector<8x1xf32>
    %cst_5 = arith.constant 9.99999974E-6 : f32
    %14 = vector.broadcast %cst_5 : f32 to vector<8x1xf32>
    %15 = arith.addf %13, %14 : vector<8x1xf32>
    %16 = math.rsqrt %15 : vector<8x1xf32>
    %c0_6 = arith.constant 0 : index
    %c0_7 = arith.constant 0 : index
    %17 = vector.load %arg2[%c0_6, %c0_7] : memref<1x32xf32, #tpu.memory_space<vmem>>, vector<1x32xf32>
    %18 = vector.broadcast %16 : vector<8x1xf32> to vector<8x32xf32>
    %19 = vector.broadcast %17 : vector<1x32xf32> to vector<8x32xf32>
    %20 = arith.mulf %18, %19 : vector<8x32xf32>
    %21 = arith.mulf %0, %20 : vector<8x32xf32>
    %c0_8 = arith.constant 0 : index
    %c0_9 = arith.constant 0 : index
    %22 = vector.load %arg3[%c0_8, %c0_9] : memref<8x32xf32, #tpu.memory_space<vmem>>, vector<8x32xf32>
    tpu.vector_store %arg3[%c0_8, %c0_9], %21 {strides = array<i32>} : memref<8x32xf32, #tpu.memory_space<vmem>>, vector<8x32xf32>,
    return
  }
  func.func @transform_0(%arg0: i32) -> (i32, i32) {
    %c0_i32 = arith.constant 0 : i32
    %c0_i32_0 = arith.constant 0 : i32
    return %arg0, %c0_i32 : i32, i32
  }
  func.func @transform_1(%arg0: i32) -> (i32, i32) {
    %c0_i32 = arith.constant 0 : i32
    %c0_i32_0 = arith.constant 0 : i32
    %c0_i32_1 = arith.constant 0 : i32
    return %c0_i32, %c0_i32_0 : i32, i32
  }
  func.func @transform_2(%arg0: i32) -> (i32, i32) {
    %c0_i32 = arith.constant 0 : i32
    %c0_i32_0 = arith.constant 0 : i32
    return %arg0, %c0_i32 : i32, i32
  }
}

</mosaic_0001>

<llo_original>
// kernel: tpu_custom_call.1
$region0: #{tpu_custom_call.1}
  #allocation0 [shape = 'u32[]', space=smem, size = 0x4, offset = 0x4, fixed_abs, tag = 'smem constant byte address 0x4 - core index']
  #allocation1 [shape = 'u32[144,128]{1,0:T(1,128)}', space=vmem, size = 0x12000, scoped, tag = 'internal scratch']
  %s0 = inlined_call_operand.hbm [shape: f32[16,32], index: 0, kind: input, shape index: {}]
  %s1 = inlined_call_operand.vmem [shape: f32[1,32], index: 1, kind: input, shape index: {}]
  %s2 = inlined_call_operand.hbm [shape: f32[16,32], index: 2, kind: output, shape index: {}]
  %s3 = sld [smem:[#allocation0]]
  $region45: #{tpu_custom_call.1} parent=0
    _
  %s5 = ssub.s32 1, %s3
  %s6 = scalar_select 0, %s5, %s3
  $region1: #{tpu_custom_call.1} parent=0
    #allocation2 [shape = 'u8[8192]{0}', space=vmem, size = 0x2000, scoped, tag = 'input window, operand 0']
    #allocation3 [shape = 's32[2]{0}', space=sflag, size = 0x8, scoped, tag = 'scoped memory for tpu_custom_call.1']
    #allocation4 [shape = 's32[2]{0}', space=sflag, size = 0x8, scoped, tag = 'scoped memory for tpu_custom_call.1']
    #allocation5 [shape = 'u8[8192]{0}', space=vmem, size = 0x2000, scoped, tag = 'output window, operand 0']
    %7 = vsyncpa [#allocation3], 0
    %s8 = scalar_lea.sflag [#allocation3], 1
    %9 = vsyncpa %s8, 0
    %10 = vsyncpa [#allocation4], 0
    %s11 = scalar_lea.sflag [#allocation4], 1
    %12 = vsyncpa %s11, 0
    loop: start=0, step=1, limit=4
    $region2: #{tpu_custom_call.1} parent=1 // loop_pre_header
      _
    $region3: #{tpu_custom_call.1} parent=1 // loop_header
      %s14 = sphi 0, %s18
      %p15 = scmp.ge.s32.totalorder %s14, 4
      %s24 = sphi 0, %s26
      %s27 = sphi 0, %s24
      %s28 = sphi 0, %s27
      %s44 = sphi 0, %s28
      %s48 = sphi 0, %s48
      %s50 = sphi 0, %s48
      %s51 = sphi 0, %s50
      %s65 = sphi 0, %s51
      %s71 = sphi 0, %s73
      %s74 = sphi 0, %s71
      %s75 = sphi 0, %s74
      %s91 = sphi 0, %s75
    $region4: #{tpu_custom_call.1} parent=1 // loop_header_branch
      %17 = sbr.rel (%p15) target = $region8
    $region5: #{tpu_custom_call.1} parent=1 // loop_body
      %s19 = ssub.s32 %s14, 1
      %s20 = ssub.s32 %s14, 2
      %s21 = sadd.s32 %s14, 1
      %s22 = ssub.s32 %s14, %s21
      %p23 = scmp.eq.s32.totalorder %s22, 0
      %s25 = sadd.s32 %s24, 1
      %s26 = scalar_select %p23, %s24, %s25
      %p29 = pneg %p23
      %p30 = scmp.eq.s32.totalorder %s14, 1
      %p31 = por %p29, %p30
      %p32 = scmp.ne.s32.totalorder %s24, %s27
      %p33 = scmp.eq.s32.totalorder %s14, 0
      %p34 = por %p32, %p33
      %p35 = scmp.ne.s32.totalorder %s24, %s27
      %p36 = scmp.eq.s32.totalorder %s19, 1
      %p37 = por %p35, %p36
      %p38 = scmp.ne.s32.totalorder %s27, %s28
      %p39 = scmp.eq.s32.totalorder %s19, 0
      %p40 = por %p38, %p39
      %p41 = scmp.ne.s32.totalorder %s27, %s28
      %p42 = scmp.eq.s32.totalorder %s20, 1
      %p43 = por %p41, %p42
      %p45 = scmp.ne.s32.totalorder %s28, %s44
      %p46 = scmp.eq.s32.totalorder %s20, 0
      %p47 = por %p45, %p46
      %s49 = sadd.s32 %s48, 1
      %p52 = scmp.eq.s32.totalorder %s14, 1
      %p53 = scmp.ne.s32.totalorder %s48, %s50
      %p54 = scmp.eq.s32.totalorder %s14, 0
      %p55 = por %p53, %p54
      %p56 = scmp.ne.s32.totalorder %s48, %s50
      %p57 = scmp.eq.s32.totalorder %s19, 1
      %p58 = por %p56, %p57
      %p59 = scmp.ne.s32.totalorder %s50, %s51
      %p60 = scmp.eq.s32.totalorder %s19, 0
      %p61 = por %p59, %p60
      %p62 = scmp.ne.s32.totalorder %s50, %s51
      %p63 = scmp.eq.s32.totalorder %s20, 1
      %p64 = por %p62, %p63
      %p66 = scmp.ne.s32.totalorder %s51, %s65
      %p67 = scmp.eq.s32.totalorder %s20, 0
      %p68 = por %p66, %p67
      %s69 = ssub.s32 %s14, %s21
      %p70 = scmp.eq.s32.totalorder %s69, 0
      %s72 = sadd.s32 %s71, 1
      %s73 = scalar_select %p70, %s71, %s72
      %p76 = pneg %p70
      %p77 = scmp.eq.s32.totalorder %s14, 1
      %p78 = por %p76, %p77
      %p79 = scmp.ne.s32.totalorder %s71, %s74
      %p80 = scmp.eq.s32.totalorder %s14, 0
      %p81 = por %p79, %p80
      %p82 = scmp.ne.s32.totalorder %s71, %s74
      %p83 = scmp.eq.s32.totalorder %s19, 1
      %p84 = por %p82, %p83
      %p85 = scmp.ne.s32.totalorder %s74, %s75
      %p86 = scmp.eq.s32.totalorder %s19, 0
      %p87 = por %p85, %p86
      %p88 = scmp.ne.s32.totalorder %s74, %s75
      %p89 = scmp.eq.s32.totalorder %s20, 1
      %p90 = por %p88, %p89
      %p92 = scmp.ne.s32.totalorder %s75, %s91
      %p93 = scmp.eq.s32.totalorder %s20, 0
      %p94 = por %p92, %p93
      %p95 = scmp.le.s32.totalorder 1, %s14
      %p96 = scmp.lt.s32.totalorder %s14, 3
      %p97 = pnand %p95, %p96
      %p98 = pneg %p97
      // Predicated region
      $region9: #{tpu_custom_call.1} parent=5 // pred_check
        _
      $region10: #{tpu_custom_call.1} parent=5 // pred_check_branch
        %100 = sbr.rel (%p97) target = $region12
      $region11: #{tpu_custom_call.1} parent=5 // pred_region
        %s101 = ssub.s32 %s14, 1
        // Predicated region
        $region13: #{tpu_custom_call.1} parent=11 // pred_check
          %p102 = pneg %p61
        $region14: #{tpu_custom_call.1} parent=11 // pred_check_branch
          %104 = sbr.rel (%p102) target = $region16
        $region15: #{tpu_custom_call.1} parent=11 // pred_region
          _
        $region16: #{tpu_custom_call.1} parent=11 // pred_fallthru
          _
      $region12: #{tpu_custom_call.1} parent=5 // pred_fallthru
        _
      %p105 = scmp.lt.s32.totalorder %s14, 2
      // Predicated region
      $region17: #{tpu_custom_call.1} parent=5 // pred_check
        %p106 = pneg %p105
      $region18: #{tpu_custom_call.1} parent=5 // pred_check_branch
        %108 = sbr.rel (%p106) target = $region20
      $region19: #{tpu_custom_call.1} parent=5 // pred_region
        // Predicated region
        $region21: #{tpu_custom_call.1} parent=19 // pred_check
          %p109 = pneg %p34
        $region22: #{tpu_custom_call.1} parent=19 // pred_check_branch
          %111 = sbr.rel (%p109) target = $region24
        $region23: #{tpu_custom_call.1} parent=19 // pred_region
          %s112 = sand.u32 %s24, 1
          %s113 = scalar_lea.sflag [#allocation3], %s112
          %s114 = sand.u32 %s24, 1
          %s115 = smul.addr %s114, 8
          %s116 = scalar_lea.vmem [#allocation2], %s115
          %s118 = ssub.s32 128, 128
          %119 = vsyncadd %s113, %s118
          %s120 = smul.addr %s14, 128
          %s121 = scalar_lea.hbm %s0, %s120
          %s123 = sshll.u32 %s116, 4
          %s124 = int_to_ptr.vmem [resolvable:$true] %s123
          %126 = dma.hbm_to_vmem [thread:$0]  %s121, 128, %s124, %s113
        $region24: #{tpu_custom_call.1} parent=19 // pred_fallthru
          _
      $region20: #{tpu_custom_call.1} parent=5 // pred_fallthru
        _
      %p127 = scmp.le.s32.totalorder 1, %s14
      %p128 = scmp.lt.s32.totalorder %s14, 3
      %p129 = pnand %p127, %p128
      %p130 = pneg %p129
      // Predicated region
      $region25: #{tpu_custom_call.1} parent=5 // pred_check
        _
      $region26: #{tpu_custom_call.1} parent=5 // pred_check_branch
        %132 = sbr.rel (%p129) target = $region28
      $region27: #{tpu_custom_call.1} parent=5 // pred_region
        %s133 = ssub.s32 %s14, 1
        %s134 = sand.u32 %s27, 1
        %s135 = scalar_lea.sflag [#allocation3], %s134
        %s136 = sand.u32 %s27, 1
        %s137 = smul.addr %s136, 8
        %s138 = scalar_lea.vmem [#allocation2], %s137
        // Predicated region
        $region29: #{tpu_custom_call.1} parent=27 // pred_check
          %p139 = pneg %p40
        $region30: #{tpu_custom_call.1} parent=27 // pred_check_branch
          %141 = sbr.rel (%p139) target = $region32
        $region31: #{tpu_custom_call.1} parent=27 // pred_region
          %142 = dma.done %s135, 128
        $region32: #{tpu_custom_call.1} parent=27 // pred_fallthru
          _
        %s143 = sand.u32 %s27, 1
        %s144 = scalar_lea.sflag [#allocation3], %s143
        %s145 = sand.u32 %s27, 1
        %s146 = smul.addr %s145, 8
        %s147 = scalar_lea.vmem [#allocation2], %s146
        %p148 = pneg %p40
        %p149 = pneg %p37
        %p150 = pneg %p61
        %p151 = pneg %p58
        %p152 = pneg %p87
        %p153 = pneg %p84
        %s154 = sand.u32 %s74, 1
        %s155 = scalar_lea.sflag [#allocation4], %s154
        %s156 = sand.u32 %s74, 1
        %s157 = smul.addr %s156, 8
        %s158 = scalar_lea.vmem [#allocation5], %s157
        %v159 = vld [vmem:[%s138] sm:$0xff]
        %vm160 = vcmask 261120
        %v161 = vsel %vm160, %v159, 0.0
        %162 = vadd.xlane.f32.xlu0 %v161
        %v163 = vpop.xlane.xlu0 %162
        %v164 = vmul.f32 %v159, %v159
        %v165 = vsel %vm160, %v164, 0.0
        %166 = vadd.xlane.f32.xlu0 %v165
        %v167 = vpop.xlane.xlu0 %166
        %v168 = vmul.f32 %v163, 0.03125
        %v169 = vmul.f32 %v167, 0.03125
        %v170 = vmul.f32 %v168, %v168
        %v171 = vsub.f32 %v169, %v170
        %v172 = vmax.f32 %v171, 0.0
        %v173 = vadd.f32 %v172, 1e-05
        %v174 = vrsqrt.pop %v173
        %v175 = vld [vmem:[%s1] sm:$0x1]
        %v177 = vlaneseq
        %v178 = vshrl.u32 %v177, 7
        %v179 = vsub.s32 0, %v178
        %v180 = vrot.slane %v175, %v179
        %v182 = vmul.f32 %v174, %v180
        %v183 = vmul.f32 %v159, %v182
        %184 = vst.msk [vmem:[%s158] sm:$0xff] %vm160, %v183
        %s185 = sand.u32 %s74, 1
        %s186 = scalar_lea.sflag [#allocation4], %s185
        %s187 = sand.u32 %s74, 1
        %s188 = smul.addr %s187, 8
        %s189 = scalar_lea.vmem [#allocation5], %s188
        // Predicated region
        $region33: #{tpu_custom_call.1} parent=27 // pred_check
          %p190 = pneg %p84
        $region34: #{tpu_custom_call.1} parent=27 // pred_check_branch
          %192 = sbr.rel (%p190) target = $region36
        $region35: #{tpu_custom_call.1} parent=27 // pred_region
          %s194 = ssub.s32 128, 128
          %195 = vsyncadd %s186, %s194
          %s196 = smul.addr %s19, 128
          %s197 = scalar_lea.hbm %s2, %s196
          %s199 = sshll.u32 %s189, 4
          %s200 = int_to_ptr.vmem [resolvable:$true] %s199
          %202 = dma.vmem_to_hbm [thread:$0]  %s200, 128, %s197, %s186
        $region36: #{tpu_custom_call.1} parent=27 // pred_fallthru
          _
      $region28: #{tpu_custom_call.1} parent=5 // pred_fallthru
        _
      %p203 = scmp.le.s32.totalorder 2, %s14
      // Predicated region
      $region37: #{tpu_custom_call.1} parent=5 // pred_check
        %p204 = pneg %p203
      $region38: #{tpu_custom_call.1} parent=5 // pred_check_branch
        %206 = sbr.rel (%p204) target = $region40
      $region39: #{tpu_custom_call.1} parent=5 // pred_region
        %s207 = ssub.s32 %s14, 2
        // Predicated region
        $region41: #{tpu_custom_call.1} parent=39 // pred_check
          %p208 = pneg %p90
        $region42: #{tpu_custom_call.1} parent=39 // pred_check_branch
          %210 = sbr.rel (%p208) target = $region44
        $region43: #{tpu_custom_call.1} parent=39 // pred_region
          %s211 = sand.u32 %s75, 1
          %s212 = scalar_lea.sflag [#allocation4], %s211
          %s213 = sand.u32 %s75, 1
          %s214 = smul.addr %s213, 8
          %s215 = scalar_lea.vmem [#allocation5], %s214
          %216 = dma.done %s212, 128
        $region44: #{tpu_custom_call.1} parent=39 // pred_fallthru
          _
      $region40: #{tpu_custom_call.1} parent=5 // pred_fallthru
        _
    $region6: #{tpu_custom_call.1} parent=1 // loop_footer
      %s18 = sadd.s32 1, %s14
    $region7: #{tpu_custom_call.1} parent=1 // loop_footer_branch
      %13 = sbr.rel target = $region3
    $region8: #{tpu_custom_call.1} parent=1 // loop_exit
      _
    %217 = vsyncpa [#allocation3], 1
    %s218 = scalar_lea.sflag [#allocation3], 1
    %219 = vsyncpa %s218, 1
    %220 = vsyncpa [#allocation4], 1
    %s221 = scalar_lea.sflag [#allocation4], 1
    %222 = vsyncpa %s221, 1

</llo_original>
